<compile_context>
chip_gen: v5e
topology: v5e:2x2
jax: 0.10.0
libtpu: 0.0.40
codegen_flags: <defaults>
</compile_context>

<pallas_src>
import functools
import math

import jax
import jax.numpy as jnp
from jax.experimental import pallas as pl
from jax.experimental.pallas import tpu as pltpu

EMBEDDING_SIZE = 32
RECURRENT_SIZE = 16


def rnnlm_kernel(tok_ref, eu_ref, wt_ref, vt_ref, h0_ref, out_ref, *, seq, batch, vocab):
    """Single-invocation kernel computing the full RNNLM forward.

    tok_ref: [seq*B, 1]     int32 token ids
    eu_ref : [vocab, R]     embedding @ U.T + (b1 + b2)   (input projection folded)
    wt_ref : [R, R]         W.T  (pre-transposed hidden->hidden weight)
    vt_ref : [R, vocab]     V.T  (pre-transposed hidden->vocab weight)
    h0_ref : [1, R]         learned initial hidden state
    out_ref: [seq*B, vocab] log-softmax output (lane-dense slab)
    """
    n = seq * batch

    # In-kernel token gather as a one-hot matmul (canonical TPU gather for a
    # 128-row table): one VPU compare over [n, vocab] + one tiny MXU pass.
    tok = tok_ref[...]                                              # [n, 1] int32
    lane = jax.lax.broadcasted_iota(jnp.int32, (n, vocab), 1)       # [n, vocab]
    onehot = (lane == tok).astype(jnp.float32)                      # [n, vocab]
    xu = jnp.dot(onehot, eu_ref[...],
                 preferred_element_type=jnp.float32)                # [n, R]

    wt = wt_ref[...]                                                # [R, R]
    h = jnp.broadcast_to(h0_ref[...], (batch, RECURRENT_SIZE))      # [B, R]

    # Serial recurrence, fully unrolled (seq is small and static).  PyTorch stores
    # the PRE-update hidden state for the output projection; keep them in vregs.
    hs_steps = []
    for step in range(seq):
        hs_steps.append(h)                                          # pre-update h
        xu_step = xu[step * batch:(step + 1) * batch, :]            # [B, R]
        h = jnp.tanh(xu_step + jnp.dot(h, wt,
                                       preferred_element_type=jnp.float32))

    hs = jnp.concatenate(hs_steps, axis=0)                          # [n, R]

    # One batched projection [n, R] x [R, vocab] + one log_softmax pass,
    # written with a single unmasked lane-dense store.
    logits = jnp.dot(hs, vt_ref[...], preferred_element_type=jnp.float32)
    m = jnp.max(logits, axis=-1, keepdims=True)
    lse = m + jnp.log(jnp.sum(jnp.exp(logits - m), axis=-1, keepdims=True))
    out_ref[...] = logits - lse


def rnnlm_forward(input_batch, params):
    """input_batch: int32 [seq, batch] token ids. Returns f32 [seq, batch, vocab]."""
    embedding = params["embedding"]   # [vocab, E]
    U = params["U"]                   # [R, E]
    W = params["W"]                   # [R, R]
    Vmat = params["V"]                # [vocab, R]
    b1 = params["bias_1"]             # [R]
    b2 = params["bias_2"]             # [R]
    h0 = params["h"].reshape(1, RECURRENT_SIZE)

    seq, batch = input_batch.shape
    vocab = Vmat.shape[0]

    # Param-only preprocessing (independent of the input batch):
    # fold the input projection and both biases into the embedding table.
    eu = embedding @ U.T + (b1 + b2)                                # [vocab, R]
    wt = W.T                                                        # [R, R]
    vt = Vmat.T                                                     # [R, vocab]

    tok = input_batch.reshape(seq * batch, 1).astype(jnp.int32)     # [seq*B, 1]

    kernel = functools.partial(rnnlm_kernel, seq=seq, batch=batch, vocab=vocab)

    out_flat = pl.pallas_call(
        kernel,
        out_shape=jax.ShapeDtypeStruct((seq * batch, vocab), jnp.float32),
        in_specs=[
            pl.BlockSpec(memory_space=pltpu.MemorySpace.VMEM),      # tok
            pl.BlockSpec(memory_space=pltpu.MemorySpace.VMEM),      # eu
            pl.BlockSpec(memory_space=pltpu.MemorySpace.VMEM),      # W.T
            pl.BlockSpec(memory_space=pltpu.MemorySpace.VMEM),      # V.T
            pl.BlockSpec(memory_space=pltpu.MemorySpace.VMEM),      # h0
        ],
        out_specs=pl.BlockSpec(memory_space=pltpu.MemorySpace.VMEM),
    )(tok, eu, wt, vt, h0)

    return out_flat.reshape(seq, batch, vocab)


def rnnlm_forward_ref(input_batch, params):
    """Pure-JAX reference mirroring the PyTorch forward exactly."""
    embedding = params["embedding"]
    U, W, Vmat = params["U"], params["W"], params["V"]
    b1, b2, h0 = params["bias_1"], params["bias_2"], params["h"]

    input_vec = embedding[input_batch]          # [seq, batch, E]
    seq, batch = input_batch.shape
    h = jnp.broadcast_to(h0, (batch, RECURRENT_SIZE))

    hiddens = []
    for step in range(seq):
        hiddens.append(h)                        # stored BEFORE update
        i_h = input_vec[step] @ U.T + b1
        h_h = h @ W.T + b2
        h = jnp.tanh(i_h + h_h)
    hidden_layer = jnp.stack(hiddens, axis=0)    # [seq, batch, R]

    h_out = hidden_layer @ Vmat.T                # [seq, batch, vocab]
    m = jnp.max(h_out, axis=2, keepdims=True)
    lse = m + jnp.log(jnp.sum(jnp.exp(h_out - m), axis=2, keepdims=True))
    return h_out - lse


def init_params(key, vocab_size):
    """Deterministic init matching reset_parameters: uniform(-stdv, stdv)."""
    stdv = 1.0 / math.sqrt(RECURRENT_SIZE)
    shapes = {
        "embedding": (vocab_size, EMBEDDING_SIZE),
        "U": (RECURRENT_SIZE, EMBEDDING_SIZE),
        "V": (vocab_size, RECURRENT_SIZE),
        "W": (RECURRENT_SIZE, RECURRENT_SIZE),
        "bias_1": (RECURRENT_SIZE,),
        "bias_2": (RECURRENT_SIZE,),
        "bias_3": (vocab_size,),   # unused in forward (kept for parity)
        "h": (RECURRENT_SIZE,),
    }
    keys = jax.random.split(key, len(shapes))
    return {
        name: jax.random.uniform(k, shape, jnp.float32, minval=-stdv, maxval=stdv)
        for k, (name, shape) in zip(keys, shapes.items())
    }


if __name__ == "__main__":
    vocab_size = 128
    seq_len = 8
    batch = 8

    root = jax.random.PRNGKey(0)
    pkey, ikey = jax.random.split(root)

    params = init_params(pkey, vocab_size)
    input_batch = jax.random.randint(ikey, (seq_len, batch), 0, vocab_size, jnp.int32)

    out = rnnlm_forward(input_batch, params)
    out = jax.block_until_ready(out)

    ref = rnnlm_forward_ref(input_batch, params)
    assert out.shape == (seq_len, batch, vocab_size)
    assert jnp.allclose(out, ref, rtol=1e-5, atol=2e-5), "mismatch vs reference"

    print("KERNEL_OK")
</pallas_src>

<mosaic_0001>
module attributes {stable_mosaic.version = 11 : i64} {
  func.func @rnnlm_kernel(%arg0: memref<64x1xi32, #tpu.memory_space<vmem>>, %arg1: memref<128x16xf32, #tpu.memory_space<vmem>>, %arg2: memref<16x16xf32, #tpu.memory_space<vmem>>, %arg3: memref<16x128xf32, #tpu.memory_space<vmem>>, %arg4: memref<1x16xf32, #tpu.memory_space<vmem>>, %arg5: memref<64x128xf32, #tpu.memory_space<vmem>>) attributes {dimension_semantics = [], scalar_prefetch = 0 : i64, scratch_operands = 0 : i64, tpu.core_type = #tpu.core_type<tc>} {
    %c0 = arith.constant 0 : index
    %c0_0 = arith.constant 0 : index
    %0 = vector.load %arg0[%c0, %c0_0] : memref<64x1xi32, #tpu.memory_space<vmem>>, vector<64x1xi32>
    %1 = tpu.iota {dimensions = array<i32: 1>} : vector<64x128xi32>
    %2 = vector.broadcast %0 : vector<64x1xi32> to vector<64x128xi32>
    %3 = arith.cmpi eq, %1, %2 : vector<64x128xi32>
    %4 = arith.extui %3 : vector<64x128xi1> to vector<64x128xi32>
    %5 = arith.sitofp %4 : vector<64x128xi32> to vector<64x128xf32>
    %c0_1 = arith.constant 0 : index
    %c0_2 = arith.constant 0 : index
    %6 = vector.load %arg1[%c0_1, %c0_2] : memref<128x16xf32, #tpu.memory_space<vmem>>, vector<128x16xf32>
    %cst = arith.constant dense<0.000000e+00> : vector<64x16xf32>
    %7 = tpu.matmul %5, %6, %cst {dimension_numbers = #tpu.dot_dimension_numbers<[1], [0], [0], [1], [0, 0, 1, 1], [], []>} : vector<64x128xf32>, vector<128x16xf32>, vector<64x16xf32> -> vector<64x16xf32>
    %c0_3 = arith.constant 0 : index
    %c0_4 = arith.constant 0 : index
    %8 = vector.load %arg2[%c0_3, %c0_4] : memref<16x16xf32, #tpu.memory_space<vmem>>, vector<16x16xf32>
    %c0_5 = arith.constant 0 : index
    %c0_6 = arith.constant 0 : index
    %9 = vector.load %arg4[%c0_5, %c0_6] : memref<1x16xf32, #tpu.memory_space<vmem>>, vector<1x16xf32>
    %10 = vector.shape_cast %9 : vector<1x16xf32> to vector<1x16xf32>
    %11 = vector.broadcast %10 : vector<1x16xf32> to vector<8x16xf32>
    %12 = vector.extract_strided_slice %7 {offsets = [0, 0], sizes = [8, 16], strides = [1, 1]} : vector<64x16xf32> to vector<8x16xf32>
    %cst_7 = arith.constant dense<0.000000e+00> : vector<8x16xf32>
    %13 = tpu.matmul %11, %8, %cst_7 {dimension_numbers = #tpu.dot_dimension_numbers<[1], [0], [0], [1], [0, 0, 1, 1], [], []>} : vector<8x16xf32>, vector<16x16xf32>, vector<8x16xf32> -> vector<8x16xf32>
    %14 = arith.addf %12, %13 : vector<8x16xf32>
    %15 = math.tanh %14 : vector<8x16xf32>
    %16 = vector.extract_strided_slice %7 {offsets = [8, 0], sizes = [8, 16], strides = [1, 1]} : vector<64x16xf32> to vector<8x16xf32>
    %cst_8 = arith.constant dense<0.000000e+00> : vector<8x16xf32>
    %17 = tpu.matmul %15, %8, %cst_8 {dimension_numbers = #tpu.dot_dimension_numbers<[1], [0], [0], [1], [0, 0, 1, 1], [], []>} : vector<8x16xf32>, vector<16x16xf32>, vector<8x16xf32> -> vector<8x16xf32>
    %18 = arith.addf %16, %17 : vector<8x16xf32>
    %19 = math.tanh %18 : vector<8x16xf32>
    %20 = vector.extract_strided_slice %7 {offsets = [16, 0], sizes = [8, 16], strides = [1, 1]} : vector<64x16xf32> to vector<8x16xf32>
    %cst_9 = arith.constant dense<0.000000e+00> : vector<8x16xf32>
    %21 = tpu.matmul %19, %8, %cst_9 {dimension_numbers = #tpu.dot_dimension_numbers<[1], [0], [0], [1], [0, 0, 1, 1], [], []>} : vector<8x16xf32>, vector<16x16xf32>, vector<8x16xf32> -> vector<8x16xf32>
    %22 = arith.addf %20, %21 : vector<8x16xf32>
    %23 = math.tanh %22 : vector<8x16xf32>
    %24 = vector.extract_strided_slice %7 {offsets = [24, 0], sizes = [8, 16], strides = [1, 1]} : vector<64x16xf32> to vector<8x16xf32>
    %cst_10 = arith.constant dense<0.000000e+00> : vector<8x16xf32>
    %25 = tpu.matmul %23, %8, %cst_10 {dimension_numbers = #tpu.dot_dimension_numbers<[1], [0], [0], [1], [0, 0, 1, 1], [], []>} : vector<8x16xf32>, vector<16x16xf32>, vector<8x16xf32> -> vector<8x16xf32>
    %26 = arith.addf %24, %25 : vector<8x16xf32>
    %27 = math.tanh %26 : vector<8x16xf32>
    %28 = vector.extract_strided_slice %7 {offsets = [32, 0], sizes = [8, 16], strides = [1, 1]} : vector<64x16xf32> to vector<8x16xf32>
    %cst_11 = arith.constant dense<0.000000e+00> : vector<8x16xf32>
    %29 = tpu.matmul %27, %8, %cst_11 {dimension_numbers = #tpu.dot_dimension_numbers<[1], [0], [0], [1], [0, 0, 1, 1], [], []>} : vector<8x16xf32>, vector<16x16xf32>, vector<8x16xf32> -> vector<8x16xf32>
    %30 = arith.addf %28, %29 : vector<8x16xf32>
    %31 = math.tanh %30 : vector<8x16xf32>
    %32 = vector.extract_strided_slice %7 {offsets = [40, 0], sizes = [8, 16], strides = [1, 1]} : vector<64x16xf32> to vector<8x16xf32>
    %cst_12 = arith.constant dense<0.000000e+00> : vector<8x16xf32>
    %33 = tpu.matmul %31, %8, %cst_12 {dimension_numbers = #tpu.dot_dimension_numbers<[1], [0], [0], [1], [0, 0, 1, 1], [], []>} : vector<8x16xf32>, vector<16x16xf32>, vector<8x16xf32> -> vector<8x16xf32>
    %34 = arith.addf %32, %33 : vector<8x16xf32>
    %35 = math.tanh %34 : vector<8x16xf32>
    %36 = vector.extract_strided_slice %7 {offsets = [48, 0], sizes = [8, 16], strides = [1, 1]} : vector<64x16xf32> to vector<8x16xf32>
    %cst_13 = arith.constant dense<0.000000e+00> : vector<8x16xf32>
    %37 = tpu.matmul %35, %8, %cst_13 {dimension_numbers = #tpu.dot_dimension_numbers<[1], [0], [0], [1], [0, 0, 1, 1], [], []>} : vector<8x16xf32>, vector<16x16xf32>, vector<8x16xf32> -> vector<8x16xf32>
    %38 = arith.addf %36, %37 : vector<8x16xf32>
    %39 = math.tanh %38 : vector<8x16xf32>
    %40 = tpu.concatenate %11, %15, %19, %23, %27, %31, %35, %39 in 0 : vector<8x16xf32>, vector<8x16xf32>, vector<8x16xf32>, vector<8x16xf32>, vector<8x16xf32>, vector<8x16xf32>, vector<8x16xf32>, vector<8x16xf32> -> vector<64x16xf32>
    %c0_14 = arith.constant 0 : index
    %c0_15 = arith.constant 0 : index
    %41 = vector.load %arg3[%c0_14, %c0_15] : memref<16x128xf32, #tpu.memory_space<vmem>>, vector<16x128xf32>
    %cst_16 = arith.constant dense<0.000000e+00> : vector<64x128xf32>
    %42 = tpu.matmul %40, %41, %cst_16 {dimension_numbers = #tpu.dot_dimension_numbers<[1], [0], [0], [1], [0, 0, 1, 1], [], []>} : vector<64x16xf32>, vector<16x128xf32>, vector<64x128xf32> -> vector<64x128xf32>
    %cst_17 = arith.constant dense<0xFF800000> : vector<64xf32>
    %43 = vector.multi_reduction <maximumf>, %42, %cst_17 [1] : vector<64x128xf32> to vector<64xf32>
    %44 = vector.shape_cast %43 : vector<64xf32> to vector<64x1xf32>
    %45 = vector.broadcast %44 : vector<64x1xf32> to vector<64x128xf32>
    %46 = arith.subf %42, %45 : vector<64x128xf32>
    %47 = math.exp %46 : vector<64x128xf32>
    %cst_18 = arith.constant dense<0.000000e+00> : vector<64xf32>
    %48 = vector.multi_reduction <add>, %47, %cst_18 [1] : vector<64x128xf32> to vector<64xf32>
    %49 = vector.shape_cast %48 : vector<64xf32> to vector<64x1xf32>
    %50 = math.log %49 : vector<64x1xf32>
    %51 = arith.addf %44, %50 : vector<64x1xf32>
    %52 = vector.broadcast %51 : vector<64x1xf32> to vector<64x128xf32>
    %53 = arith.subf %42, %52 : vector<64x128xf32>
    %c0_19 = arith.constant 0 : index
    %c0_20 = arith.constant 0 : index
    %54 = vector.load %arg5[%c0_19, %c0_20] : memref<64x128xf32, #tpu.memory_space<vmem>>, vector<64x128xf32>
    tpu.vector_store %arg5[%c0_19, %c0_20], %53 {strides = array<i32>} : memref<64x128xf32, #tpu.memory_space<vmem>>, vector<64x128xf32>,
    return
  }
}

</mosaic_0001>

<llo_original>
// kernel: tpu_custom_call.1
$region0: #{tpu_custom_call.1}
  #allocation0 [shape = 'u32[]', space=smem, size = 0x4, offset = 0x4, fixed_abs, tag = 'smem constant byte address 0x4 - core index']
  #allocation1 [shape = 'u32[72,128]{1,0:T(1,128)}', space=vmem, size = 0x9000, scoped, tag = 'internal scratch']
  %s0 = inlined_call_operand.vmem [shape: s32[64,1], index: 0, kind: input, shape index: {}]
  %s1 = inlined_call_operand.vmem [shape: f32[128,16], index: 1, kind: input, shape index: {}]
  %s2 = inlined_call_operand.vmem [shape: f32[16,16], index: 2, kind: input, shape index: {}]
  %s3 = inlined_call_operand.vmem [shape: f32[16,128], index: 3, kind: input, shape index: {}]
  %s4 = inlined_call_operand.vmem [shape: f32[1,16], index: 4, kind: input, shape index: {}]
  %s5 = inlined_call_operand.hbm [shape: f32[64,128], index: 5, kind: output, shape index: {}]
  %s6 = sld [smem:[#allocation0]]
  $region30: #{tpu_custom_call.1} parent=0
    _
  %s8 = ssub.s32 1, %s6
  %s9 = scalar_select 0, %s8, %s6
  $region1: #{tpu_custom_call.1} parent=0
    #allocation2 [shape = 'u8[32768]{0}', space=vmem, size = 0x8000, scoped, tag = 'output window, operand 0, single buffered']
    #allocation3 [shape = 's32[1]{0}', space=sflag, size = 0x4, scoped, tag = 'scoped memory for tpu_custom_call.1']
    %10 = vsyncpa [#allocation3], 0
    // Predicated region
    $region2: #{tpu_custom_call.1} parent=1 // pred_check
      _
    $region3: #{tpu_custom_call.1} parent=1 // pred_check_branch
      %12 = sbr.rel (0) target = $region5
    $region4: #{tpu_custom_call.1} parent=1 // pred_region
      _
    $region5: #{tpu_custom_call.1} parent=1 // pred_fallthru
      _
    // Predicated region
    $region6: #{tpu_custom_call.1} parent=1 // pred_check
      _
    $region7: #{tpu_custom_call.1} parent=1 // pred_check_branch
      %14 = sbr.rel (0) target = $region9
    $region8: #{tpu_custom_call.1} parent=1 // pred_region
      _
    $region9: #{tpu_custom_call.1} parent=1 // pred_fallthru
      _
    // Predicated region
    $region10: #{tpu_custom_call.1} parent=1 // pred_check
      _
    $region11: #{tpu_custom_call.1} parent=1 // pred_check_branch
      %16 = sbr.rel (0) target = $region13
    $region12: #{tpu_custom_call.1} parent=1 // pred_region
      _
    $region13: #{tpu_custom_call.1} parent=1 // pred_fallthru
      _
    // Predicated region
    $region14: #{tpu_custom_call.1} parent=1 // pred_check
      _
    $region15: #{tpu_custom_call.1} parent=1 // pred_check_branch
      %18 = sbr.rel (0) target = $region17
    $region16: #{tpu_custom_call.1} parent=1 // pred_region
      _
    $region17: #{tpu_custom_call.1} parent=1 // pred_fallthru
      _
    // Predicated region
    $region18: #{tpu_custom_call.1} parent=1 // pred_check
      _
    $region19: #{tpu_custom_call.1} parent=1 // pred_check_branch
      %20 = sbr.rel (0) target = $region21
    $region20: #{tpu_custom_call.1} parent=1 // pred_region
      _
    $region21: #{tpu_custom_call.1} parent=1 // pred_fallthru
      _
    %v21 = vld [vmem:[%s0] sm:$0xff]
    %v22 = vld [vmem:[%s0 + $0x8] sm:$0xff]
    %v23 = vld [vmem:[%s0 + $0x10] sm:$0xff]
    %v24 = vld [vmem:[%s0 + $0x18] sm:$0xff]
    %v25 = vld [vmem:[%s0 + $0x20] sm:$0xff]
    %v26 = vld [vmem:[%s0 + $0x28] sm:$0xff]
    %v27 = vld [vmem:[%s0 + $0x30] sm:$0xff]
    %v28 = vld [vmem:[%s0 + $0x38] sm:$0xff]
    %v29 = vlaneseq
    %v30 = vand.u32 %v29, 127
    %31 = vset.pattern.permute.xlu0 0
    %32 = vperm.xlu0 %31, %v21
    %v33 = vpop.permute.xlu0 %32
    %34 = vset.pattern.permute.xlu0 0
    %35 = vperm.xlu0 %34, %v22
    %v36 = vpop.permute.xlu0 %35
    %37 = vset.pattern.permute.xlu0 0
    %38 = vperm.xlu0 %37, %v23
    %v39 = vpop.permute.xlu0 %38
    %40 = vset.pattern.permute.xlu0 0
    %41 = vperm.xlu0 %40, %v24
    %v42 = vpop.permute.xlu0 %41
    %43 = vset.pattern.permute.xlu0 0
    %44 = vperm.xlu0 %43, %v25
    %v45 = vpop.permute.xlu0 %44
    %46 = vset.pattern.permute.xlu0 0
    %47 = vperm.xlu0 %46, %v26
    %v48 = vpop.permute.xlu0 %47
    %49 = vset.pattern.permute.xlu0 0
    %50 = vperm.xlu0 %49, %v27
    %v51 = vpop.permute.xlu0 %50
    %52 = vset.pattern.permute.xlu0 0
    %53 = vperm.xlu0 %52, %v28
    %v54 = vpop.permute.xlu0 %53
    %vm55 = vcmp.eq.s32.totalorder %v30, %v33
    %vm56 = vcmp.eq.s32.totalorder %v30, %v36
    %vm57 = vcmp.eq.s32.totalorder %v30, %v39
    %vm58 = vcmp.eq.s32.totalorder %v30, %v42
    %vm59 = vcmp.eq.s32.totalorder %v30, %v45
    %vm60 = vcmp.eq.s32.totalorder %v30, %v48
    %vm61 = vcmp.eq.s32.totalorder %v30, %v51
    %vm62 = vcmp.eq.s32.totalorder %v30, %v54
    %v63 = vsel %vm55, 1, 0
    %v64 = vsel %vm56, 1, 0
    %v65 = vsel %vm57, 1, 0
    %v66 = vsel %vm58, 1, 0
    %v67 = vsel %vm59, 1, 0
    %v68 = vsel %vm60, 1, 0
    %v69 = vsel %vm61, 1, 0
    %v70 = vsel %vm62, 1, 0
    %v71 = vcvt.s32.f32 %v63
    %v72 = vcvt.s32.f32 %v64
    %v73 = vcvt.s32.f32 %v65
    %v74 = vcvt.s32.f32 %v66
    %v75 = vcvt.s32.f32 %v67
    %v76 = vcvt.s32.f32 %v68
    %v77 = vcvt.s32.f32 %v69
    %v78 = vcvt.s32.f32 %v70
    %v79 = vld [vmem:[%s1] sm:$0xff]
    %v80 = vld [vmem:[%s1 + $0x8] sm:$0xff]
    %v81 = vld [vmem:[%s1 + $0x10] sm:$0xff]
    %v82 = vld [vmem:[%s1 + $0x18] sm:$0xff]
    %v83 = vld [vmem:[%s1 + $0x20] sm:$0xff]
    %v84 = vld [vmem:[%s1 + $0x28] sm:$0xff]
    %v85 = vld [vmem:[%s1 + $0x30] sm:$0xff]
    %v86 = vld [vmem:[%s1 + $0x38] sm:$0xff]
    %v87 = vld [vmem:[%s1 + $0x40] sm:$0xff]
    %v88 = vld [vmem:[%s1 + $0x48] sm:$0xff]
    %v89 = vld [vmem:[%s1 + $0x50] sm:$0xff]
    %v90 = vld [vmem:[%s1 + $0x58] sm:$0xff]
    %v91 = vld [vmem:[%s1 + $0x60] sm:$0xff]
    %v92 = vld [vmem:[%s1 + $0x68] sm:$0xff]
    %v93 = vld [vmem:[%s1 + $0x70] sm:$0xff]
    %v94 = vld [vmem:[%s1 + $0x78] sm:$0xff]
    %95 = vmatpush.msra.mxu0 %v94
    %96 = vmatpush.msra.mxu0 %v93
    %97 = vmatpush.msra.mxu0 %v92
    %98 = vmatpush.msra.mxu0 %v91
    %99 = vmatpush.msra.mxu0 %v90
    %100 = vmatpush.msra.mxu0 %v89
    %101 = vmatpush.msra.mxu0 %v88
    %102 = vmatpush.msra.mxu0 %v87
    %103 = vmatpush.msra.mxu0 %v86
    %104 = vmatpush.msra.mxu0 %v85
    %105 = vmatpush.msra.mxu0 %v84
    %106 = vmatpush.msra.mxu0 %v83
    %107 = vmatpush.msra.mxu0 %v82
    %108 = vmatpush.msra.mxu0 %v81
    %109 = vmatpush.msra.mxu0 %v80
    %110 = vmatpush.msra.mxu0 %v79
    %111 = vmatmul.f32.gmra.mxu0 %v71
    %v112 = vpop.f32.mrf.mxu0
    %v113 = vadd.f32 0.0, %v112
    %114 = vmatmul.f32.gmra.mxu0 %v72
    %v115 = vpop.f32.mrf.mxu0
    %v116 = vadd.f32 0.0, %v115
    %117 = vmatmul.f32.gmra.mxu0 %v73
    %v118 = vpop.f32.mrf.mxu0
    %v119 = vadd.f32 0.0, %v118
    %120 = vmatmul.f32.gmra.mxu0 %v74
    %v121 = vpop.f32.mrf.mxu0
    %v122 = vadd.f32 0.0, %v121
    %123 = vmatmul.f32.gmra.mxu0 %v75
    %v124 = vpop.f32.mrf.mxu0
    %v125 = vadd.f32 0.0, %v124
    %126 = vmatmul.f32.gmra.mxu0 %v76
    %v127 = vpop.f32.mrf.mxu0
    %v128 = vadd.f32 0.0, %v127
    %129 = vmatmul.f32.gmra.mxu0 %v77
    %v130 = vpop.f32.mrf.mxu0
    %v131 = vadd.f32 0.0, %v130
    %132 = vmatmul.f32.gmra.mxu0 %v78
    %v133 = vpop.f32.mrf.mxu0
    %134 = vdwg.mxu0
    %v135 = vld [vmem:[%s2] sm:$0xff]
    %v136 = vld [vmem:[%s2 + $0x8] sm:$0xff]
    %v137 = vld [vmem:[%s4] sm:$0x1]
    %v139 = vperm.slane %v137, 0
    %vm140 = vcmask 130048
    %v141 = vsel %vm140, %v139, 0
    %143 = vmatpush.msra.mxu0 0.0
    %144 = vmatpush.msra.mxu0 0.0
    %145 = vmatpush.msra.mxu0 0.0
    %146 = vmatpush.msra.mxu0 0.0
    %147 = vmatpush.msra.mxu0 0.0
    %148 = vmatpush.msra.mxu0 0.0
    %149 = vmatpush.msra.mxu0 0.0
    %150 = vmatpush.msra.mxu0 0.0
    %151 = vmatpush.msra.mxu0 0.0
    %152 = vmatpush.msra.mxu0 0.0
    %153 = vmatpush.msra.mxu0 0.0
    %154 = vmatpush.msra.mxu0 0.0
    %155 = vmatpush.msra.mxu0 0.0
    %156 = vmatpush.msra.mxu0 0.0
    %157 = vmatpush.msra.mxu0 %v136
    %158 = vmatpush.msra.mxu0 %v135
    %159 = vmatmul.f32.gmra.mxu0 %v141
    %v160 = vpop.f32.mrf.mxu0
    %v161 = vadd.f32 0.0, %v160
    %162 = vdwg.mxu0
    %v163 = vadd.f32 %v113, %v161
    %v164 = vtanh.pop %v163
    %v166 = vsel %vm140, %v164, 0
    %168 = vmatpush.msra.mxu0 0.0
    %169 = vmatpush.msra.mxu0 0.0
    %170 = vmatpush.msra.mxu0 0.0
    %171 = vmatpush.msra.mxu0 0.0
    %172 = vmatpush.msra.mxu0 0.0
    %173 = vmatpush.msra.mxu0 0.0
    %174 = vmatpush.msra.mxu0 0.0
    %175 = vmatpush.msra.mxu0 0.0
    %176 = vmatpush.msra.mxu0 0.0
    %177 = vmatpush.msra.mxu0 0.0
    %178 = vmatpush.msra.mxu0 0.0
    %179 = vmatpush.msra.mxu0 0.0
    %180 = vmatpush.msra.mxu0 0.0
    %181 = vmatpush.msra.mxu0 0.0
    %182 = vmatpush.msra.mxu0 %v136
    %183 = vmatpush.msra.mxu0 %v135
    %184 = vmatmul.f32.gmra.mxu0 %v166
    %v185 = vpop.f32.mrf.mxu0
    %v186 = vadd.f32 0.0, %v185
    %187 = vdwg.mxu0
    %v188 = vadd.f32 %v116, %v186
    %v189 = vtanh.pop %v188
    %v191 = vsel %vm140, %v189, 0
    %193 = vmatpush.msra.mxu0 0.0
    %194 = vmatpush.msra.mxu0 0.0
    %195 = vmatpush.msra.mxu0 0.0
    %196 = vmatpush.msra.mxu0 0.0
    %197 = vmatpush.msra.mxu0 0.0
    %198 = vmatpush.msra.mxu0 0.0
    %199 = vmatpush.msra.mxu0 0.0
    %200 = vmatpush.msra.mxu0 0.0
    %201 = vmatpush.msra.mxu0 0.0
    %202 = vmatpush.msra.mxu0 0.0
    %203 = vmatpush.msra.mxu0 0.0
    %204 = vmatpush.msra.mxu0 0.0
    %205 = vmatpush.msra.mxu0 0.0
    %206 = vmatpush.msra.mxu0 0.0
    %207 = vmatpush.msra.mxu0 %v136
    %208 = vmatpush.msra.mxu0 %v135
    %209 = vmatmul.f32.gmra.mxu0 %v191
    %v210 = vpop.f32.mrf.mxu0
    %v211 = vadd.f32 0.0, %v210
    %212 = vdwg.mxu0
    %v213 = vadd.f32 %v119, %v211
    %v214 = vtanh.pop %v213
    %v216 = vsel %vm140, %v214, 0
    %218 = vmatpush.msra.mxu0 0.0
    %219 = vmatpush.msra.mxu0 0.0
    %220 = vmatpush.msra.mxu0 0.0
    %221 = vmatpush.msra.mxu0 0.0
    %222 = vmatpush.msra.mxu0 0.0
    %223 = vmatpush.msra.mxu0 0.0
    %224 = vmatpush.msra.mxu0 0.0
    %225 = vmatpush.msra.mxu0 0.0
    %226 = vmatpush.msra.mxu0 0.0
    %227 = vmatpush.msra.mxu0 0.0
    %228 = vmatpush.msra.mxu0 0.0
    %229 = vmatpush.msra.mxu0 0.0
    %230 = vmatpush.msra.mxu0 0.0
    %231 = vmatpush.msra.mxu0 0.0
    %232 = vmatpush.msra.mxu0 %v136
    %233 = vmatpush.msra.mxu0 %v135
    %234 = vmatmul.f32.gmra.mxu0 %v216
    %v235 = vpop.f32.mrf.mxu0
    %v236 = vadd.f32 0.0, %v235
    %237 = vdwg.mxu0
    %v238 = vadd.f32 %v122, %v236
    %v239 = vtanh.pop %v238
    %v241 = vsel %vm140, %v239, 0
    %243 = vmatpush.msra.mxu0 0.0
    %244 = vmatpush.msra.mxu0 0.0
    %245 = vmatpush.msra.mxu0 0.0
    %246 = vmatpush.msra.mxu0 0.0
    %247 = vmatpush.msra.mxu0 0.0
    %248 = vmatpush.msra.mxu0 0.0
    %249 = vmatpush.msra.mxu0 0.0
    %250 = vmatpush.msra.mxu0 0.0
    %251 = vmatpush.msra.mxu0 0.0
    %252 = vmatpush.msra.mxu0 0.0
    %253 = vmatpush.msra.mxu0 0.0
    %254 = vmatpush.msra.mxu0 0.0
    %255 = vmatpush.msra.mxu0 0.0
    %256 = vmatpush.msra.mxu0 0.0
    %257 = vmatpush.msra.mxu0 %v136
    %258 = vmatpush.msra.mxu0 %v135
    %259 = vmatmul.f32.gmra.mxu0 %v241
    %v260 = vpop.f32.mrf.mxu0
    %v261 = vadd.f32 0.0, %v260
    %262 = vdwg.mxu0
    %v263 = vadd.f32 %v125, %v261
    %v264 = vtanh.pop %v263
    %v266 = vsel %vm140, %v264, 0
    %268 = vmatpush.msra.mxu0 0.0
    %269 = vmatpush.msra.mxu0 0.0
    %270 = vmatpush.msra.mxu0 0.0
    %271 = vmatpush.msra.mxu0 0.0
    %272 = vmatpush.msra.mxu0 0.0
    %273 = vmatpush.msra.mxu0 0.0
    %274 = vmatpush.msra.mxu0 0.0
    %275 = vmatpush.msra.mxu0 0.0
    %276 = vmatpush.msra.mxu0 0.0
    %277 = vmatpush.msra.mxu0 0.0
    %278 = vmatpush.msra.mxu0 0.0
    %279 = vmatpush.msra.mxu0 0.0
    %280 = vmatpush.msra.mxu0 0.0
    %281 = vmatpush.msra.mxu0 0.0
    %282 = vmatpush.msra.mxu0 %v136
    %283 = vmatpush.msra.mxu0 %v135
    %284 = vmatmul.f32.gmra.mxu0 %v266
    %v285 = vpop.f32.mrf.mxu0
    %v286 = vadd.f32 0.0, %v285
    %287 = vdwg.mxu0
    %v288 = vadd.f32 %v128, %v286
    %v289 = vtanh.pop %v288
    %v291 = vsel %vm140, %v289, 0
    %293 = vmatpush.msra.mxu0 0.0
    %294 = vmatpush.msra.mxu0 0.0
    %295 = vmatpush.msra.mxu0 0.0
    %296 = vmatpush.msra.mxu0 0.0
    %297 = vmatpush.msra.mxu0 0.0
    %298 = vmatpush.msra.mxu0 0.0
    %299 = vmatpush.msra.mxu0 0.0
    %300 = vmatpush.msra.mxu0 0.0
    %301 = vmatpush.msra.mxu0 0.0
    %302 = vmatpush.msra.mxu0 0.0
    %303 = vmatpush.msra.mxu0 0.0
    %304 = vmatpush.msra.mxu0 0.0
    %305 = vmatpush.msra.mxu0 0.0
    %306 = vmatpush.msra.mxu0 0.0
    %307 = vmatpush.msra.mxu0 %v136
    %308 = vmatpush.msra.mxu0 %v135
    %309 = vmatmul.f32.gmra.mxu0 %v291
    %v310 = vpop.f32.mrf.mxu0
    %v311 = vadd.f32 0.0, %v310
    %312 = vdwg.mxu0
    %v313 = vadd.f32 %v131, %v311
    %v314 = vtanh.pop %v313
    %v315 = vld [vmem:[%s3] sm:$0xff]
    %v316 = vld [vmem:[%s3 + $0x8] sm:$0xff]
    %v318 = vsel %vm140, %v314, 0
    %320 = vmatpush.msra.mxu0 0.0
    %321 = vmatpush.msra.mxu0 0.0
    %322 = vmatpush.msra.mxu0 0.0
    %323 = vmatpush.msra.mxu0 0.0
    %324 = vmatpush.msra.mxu0 0.0
    %325 = vmatpush.msra.mxu0 0.0
    %326 = vmatpush.msra.mxu0 0.0
    %327 = vmatpush.msra.mxu0 0.0
    %328 = vmatpush.msra.mxu0 0.0
    %329 = vmatpush.msra.mxu0 0.0
    %330 = vmatpush.msra.mxu0 0.0
    %331 = vmatpush.msra.mxu0 0.0
    %332 = vmatpush.msra.mxu0 0.0
    %333 = vmatpush.msra.mxu0 0.0
    %334 = vmatpush.msra.mxu0 %v316
    %335 = vmatpush.msra.mxu0 %v315
    %336 = vmatmul.f32.gmra.mxu0 %v141
    %v337 = vpop.f32.mrf.mxu0
    %v338 = vadd.f32 0.0, %v337
    %339 = vmatmul.f32.gmra.mxu0 %v166
    %v340 = vpop.f32.mrf.mxu0
    %v341 = vadd.f32 0.0, %v340
    %342 = vmatmul.f32.gmra.mxu0 %v191
    %v343 = vpop.f32.mrf.mxu0
    %v344 = vadd.f32 0.0, %v343
    %345 = vmatmul.f32.gmra.mxu0 %v216
    %v346 = vpop.f32.mrf.mxu0
    %v347 = vadd.f32 0.0, %v346
    %348 = vmatmul.f32.gmra.mxu0 %v241
    %v349 = vpop.f32.mrf.mxu0
    %v350 = vadd.f32 0.0, %v349
    %351 = vmatmul.f32.gmra.mxu0 %v266
    %v352 = vpop.f32.mrf.mxu0
    %v353 = vadd.f32 0.0, %v352
    %354 = vmatmul.f32.gmra.mxu0 %v291
    %v355 = vpop.f32.mrf.mxu0
    %v356 = vadd.f32 0.0, %v355
    %357 = vmatmul.f32.gmra.mxu0 %v318
    %v358 = vpop.f32.mrf.mxu0
    %v359 = vadd.f32 0.0, %v358
    %360 = vdwg.mxu0
    %361 = vmax.xlane.f32.xlu0 %v338
    %v362 = vpop.xlane.xlu0 %361
    %363 = vmax.xlane.f32.xlu0 %v341
    %v364 = vpop.xlane.xlu0 %363
    %365 = vmax.xlane.f32.xlu0 %v344
    %v366 = vpop.xlane.xlu0 %365
    %367 = vmax.xlane.f32.xlu0 %v347
    %v368 = vpop.xlane.xlu0 %367
    %369 = vmax.xlane.f32.xlu0 %v350
    %v370 = vpop.xlane.xlu0 %369
    %371 = vmax.xlane.f32.xlu0 %v353
    %v372 = vpop.xlane.xlu0 %371
    %373 = vmax.xlane.f32.xlu0 %v356
    %v374 = vpop.xlane.xlu0 %373
    %375 = vmax.xlane.f32.xlu0 %v359
    %v376 = vpop.xlane.xlu0 %375
    %v377 = vsub.f32 %v338, %v362
    %v378 = vsub.f32 %v341, %v364
    %v379 = vsub.f32 %v344, %v366
    %v380 = vsub.f32 %v347, %v368
    %v381 = vsub.f32 %v350, %v370
    %v382 = vsub.f32 %v353, %v372
    %v383 = vsub.f32 %v356, %v374
    %v384 = vsub.f32 %v359, %v376
    %v385 = vmul.f32 %v377, 1.442695
    %v386 = vpow.pop %v385
    %v387 = vmul.f32 %v378, 1.442695
    %v388 = vpow.pop %v387
    %v389 = vmul.f32 %v379, 1.442695
    %v390 = vpow.pop %v389
    %v391 = vmul.f32 %v380, 1.442695
    %v392 = vpow.pop %v391
    %v393 = vmul.f32 %v381, 1.442695
    %v394 = vpow.pop %v393
    %v395 = vmul.f32 %v382, 1.442695
    %v396 = vpow.pop %v395
    %v397 = vmul.f32 %v383, 1.442695
    %v398 = vpow.pop %v397
    %v399 = vmul.f32 %v384, 1.442695
    %v400 = vpow.pop %v399
    %401 = vadd.xlane.f32.xlu0 %v386
    %v402 = vpop.xlane.xlu0 %401
    %403 = vadd.xlane.f32.xlu0 %v388
    %v404 = vpop.xlane.xlu0 %403
    %405 = vadd.xlane.f32.xlu0 %v390
    %v406 = vpop.xlane.xlu0 %405
    %407 = vadd.xlane.f32.xlu0 %v392
    %v408 = vpop.xlane.xlu0 %407
    %409 = vadd.xlane.f32.xlu0 %v394
    %v410 = vpop.xlane.xlu0 %409
    %411 = vadd.xlane.f32.xlu0 %v396
    %v412 = vpop.xlane.xlu0 %411
    %413 = vadd.xlane.f32.xlu0 %v398
    %v414 = vpop.xlane.xlu0 %413
    %415 = vadd.xlane.f32.xlu0 %v400
    %v416 = vpop.xlane.xlu0 %415
    %v417 = vlog2.pop %v402
    %v418 = vmul.f32 %v417, 0.6931472
    %v419 = vlog2.pop %v404
    %v420 = vmul.f32 %v419, 0.6931472
    %v421 = vlog2.pop %v406
    %v422 = vmul.f32 %v421, 0.6931472
    %v423 = vlog2.pop %v408
    %v424 = vmul.f32 %v423, 0.6931472
    %v425 = vlog2.pop %v410
    %v426 = vmul.f32 %v425, 0.6931472
    %v427 = vlog2.pop %v412
    %v428 = vmul.f32 %v427, 0.6931472
    %v429 = vlog2.pop %v414
    %v430 = vmul.f32 %v429, 0.6931472
    %v431 = vlog2.pop %v416
    %v432 = vmul.f32 %v431, 0.6931472
    %v433 = vadd.f32 %v362, %v418
    %v434 = vadd.f32 %v364, %v420
    %v435 = vadd.f32 %v366, %v422
    %v436 = vadd.f32 %v368, %v424
    %v437 = vadd.f32 %v370, %v426
    %v438 = vadd.f32 %v372, %v428
    %v439 = vadd.f32 %v374, %v430
    %v440 = vadd.f32 %v376, %v432
    %v441 = vsub.f32 %v338, %v433
    %v442 = vsub.f32 %v341, %v434
    %v443 = vsub.f32 %v344, %v435
    %v444 = vsub.f32 %v347, %v436
    %v445 = vsub.f32 %v350, %v437
    %v446 = vsub.f32 %v353, %v438
    %v447 = vsub.f32 %v356, %v439
    %v448 = vsub.f32 %v359, %v440
    %449 = vst [vmem:[#allocation2] sm:$0xff] %v441
    %450 = vst [vmem:[#allocation2 + $0x8] sm:$0xff] %v442
    %451 = vst [vmem:[#allocation2 + $0x10] sm:$0xff] %v443
    %452 = vst [vmem:[#allocation2 + $0x18] sm:$0xff] %v444
    %453 = vst [vmem:[#allocation2 + $0x20] sm:$0xff] %v445
    %454 = vst [vmem:[#allocation2 + $0x28] sm:$0xff] %v446
    %455 = vst [vmem:[#allocation2 + $0x30] sm:$0xff] %v447
    %456 = vst [vmem:[#allocation2 + $0x38] sm:$0xff] %v448
    // Predicated region
    $region22: #{tpu_custom_call.1} parent=1 // pred_check
      _
    $region23: #{tpu_custom_call.1} parent=1 // pred_check_branch
      %458 = sbr.rel (0) target = $region25
    $region24: #{tpu_custom_call.1} parent=1 // pred_region
      %460 = vsyncadd [#allocation3], 0
      %s461 = sshll.u32 [#allocation2], 4
      %s462 = int_to_ptr.vmem [resolvable:$true] %s461
      %s463 = sshll.u32 %s5, 4
      %s464 = int_to_ptr.hbm [resolvable:$true] %s463
      %469 = dma.vmem_to_hbm [thread:$0]  %s462, 1024, %s464, [#allocation3], 128, 128, 8
    $region25: #{tpu_custom_call.1} parent=1 // pred_fallthru
      _
    // Predicated region
    $region26: #{tpu_custom_call.1} parent=1 // pred_check
      _
    $region27: #{tpu_custom_call.1} parent=1 // pred_check_branch
      %471 = sbr.rel (0) target = $region29
    $region28: #{tpu_custom_call.1} parent=1 // pred_region
      %473 = dma.done [#allocation3], 1024
    $region29: #{tpu_custom_call.1} parent=1 // pred_fallthru
      _
    %474 = vsyncpa [#allocation3], 1

</llo_original>
